<compile_context>
chip_gen: v7x
topology: tpu7x:2x2x1
jax: 0.10.0
libtpu: 0.0.40
codegen_flags: <defaults>
</compile_context>

<pallas_src>
import jax
import jax.numpy as jnp
from jax.experimental import pallas as pl
from jax.experimental.pallas import tpu as pltpu


def mlp_kernel(xT_ref, w1T_ref, b1_ref, w2T_ref, b2_ref, w3T_ref, b3_ref, o_ref):
    xT = xT_ref[...]                                   # (2, TB), batch lane-dense

    # fc1: K=2 contraction on the VPU as two broadcast FMAs (skip the MXU).
    # (H,1)*(1,TB) broadcasts -> (H, TB); hidden on sublanes, batch on lanes.
    w1T = w1T_ref[...]                                 # (H, 2)
    h1 = (w1T[:, 0:1] * xT[0:1, :]
          + w1T[:, 1:2] * xT[1:2, :]
          + b1_ref[...])                               # (H, TB)
    h1 = jnp.maximum(h1, 0.0)                          # ReLU

    # fc2: the real MXU work, (H, H) @ (H, TB) with f32 accumulation.
    h2 = jnp.dot(w2T_ref[...], h1,
                 preferred_element_type=jnp.float32) + b2_ref[...]
    h2 = jnp.maximum(h2, 0.0)                          # ReLU

    # fc3: (2, H) @ (H, TB) -> lane-dense (2, TB) output slab, unmasked stores.
    o = jnp.dot(w3T_ref[...], h2,
                preferred_element_type=jnp.float32) + b3_ref[...]
    o_ref[...] = o.astype(o_ref.dtype)


def _choose_tile(B, tb_req):
    """Pick a lane-aligned batch tile; prefer >=2 grid steps for v7x megacore."""
    LANE = 128
    Bp_lane = pl.cdiv(B, LANE) * LANE                  # lane-aligned cover of B
    tb = max(LANE, (tb_req // LANE) * LANE)
    tb = min(tb, Bp_lane)                              # never larger than needed
    if Bp_lane >= 2 * LANE and tb > Bp_lane // 2:
        # shrink so the grid has at least 2 steps -> both v7x TensorCores work
        tb = max(LANE, (Bp_lane // 2 // LANE) * LANE)
    Bp = pl.cdiv(Bp_lane, tb) * tb
    return tb, Bp


def mlp_forward(x, kparams, *, tb=1024):
    """x: (B, 2) f32.  kparams: transposed + hidden-padded params (see kernel_params)."""
    w1T, b1, w2T, b2, w3T, b3 = kparams
    B, in_dim = x.shape
    out_dim = w3T.shape[0]
    H = w1T.shape[0]

    tb, Bp = _choose_tile(B, tb)

    # Transposed, lane-dense input; pad only when the tile does not divide the batch.
    xT = x.T                                           # (2, B) -- tiny XLA transpose
    if Bp != B:
        xT = jnp.pad(xT, ((0, 0), (0, Bp - B)))

    # Weights/biases are ~17 KiB total; keep them VMEM-resident across batch tiles.
    resident = lambda a: pl.BlockSpec(a.shape, lambda i: (0, 0))

    oT = pl.pallas_call(
        mlp_kernel,
        out_shape=jax.ShapeDtypeStruct((out_dim, Bp), x.dtype),
        grid=(Bp // tb,),
        in_specs=[
            pl.BlockSpec((in_dim, tb), lambda i: (0, i)),   # x^T: tiled over batch lanes
            resident(w1T), resident(b1),
            resident(w2T), resident(b2),
            resident(w3T), resident(b3),
        ],
        out_specs=pl.BlockSpec((out_dim, tb), lambda i: (0, i)),
        compiler_params=pltpu.CompilerParams(
            dimension_semantics=("parallel",)),             # shard batch tiles across TCs
    )(xT, w1T, b1, w2T, b2, w3T, b3)

    out = oT.T                                         # (Bp, 2)
    return out if Bp == B else out[:B]


def init_params(key):
    """Deterministic init mimicking torch.nn.Linear (uniform +-1/sqrt(fan_in)).

    Stored as (in_features, out_features) so the reference computes x @ W + b.
    """
    dims = [(2, 50), (50, 50), (50, 2)]
    params = []
    for i, (fan_in, fan_out) in enumerate(dims):
        kw, kb = jax.random.split(jax.random.fold_in(key, i))
        bound = 1.0 / jnp.sqrt(fan_in)
        w = jax.random.uniform(kw, (fan_in, fan_out), jnp.float32, -bound, bound)
        b = jax.random.uniform(kb, (fan_out,), jnp.float32, -bound, bound)
        params += [w, b]
    return tuple(params)


def kernel_params(params, hidden_pad=64):
    """Transpose to the lane-dense layout and zero-pad the hidden dim 50 -> hidden_pad.

    Zero rows/cols + ReLU(0)=0 guarantee the padded network computes identical outputs.
    """
    w1, b1, w2, b2, w3, b3 = params
    h = w1.shape[1]
    p = hidden_pad - h
    w1T = jnp.pad(w1.T, ((0, p), (0, 0)))                       # (H, 2)
    b1c = jnp.pad(b1.reshape(-1, 1), ((0, p), (0, 0)))          # (H, 1)
    w2T = jnp.pad(w2.T, ((0, p), (0, p)))                       # (H, H)
    b2c = jnp.pad(b2.reshape(-1, 1), ((0, p), (0, 0)))          # (H, 1)
    w3T = jnp.pad(w3.T, ((0, 0), (0, p)))                       # (2, H)
    b3c = b3.reshape(-1, 1)                                     # (2, 1)
    return (w1T, b1c, w2T, b2c, w3T, b3c)


def mlp_reference(x, params):
    w1, b1, w2, b2, w3, b3 = params
    h = jax.nn.relu(x @ w1 + b1)
    h = jax.nn.relu(h @ w2 + b2)
    return h @ w3 + b3


if __name__ == "__main__":
    key = jax.random.PRNGKey(0)
    kx, kp = jax.random.split(key)

    B = 8
    x = jax.random.normal(kx, (B, 2), dtype=jnp.float32)

    params = init_params(kp)                  # logical (unpadded) params for reference
    kparams = kernel_params(params, 64)       # transposed, lane-dense, hidden-padded

    out = mlp_forward(x, kparams)
    out = jax.block_until_ready(out)

    ref = mlp_reference(x, params)
    assert out.shape == (B, 2), out.shape
    assert jnp.allclose(out, ref, atol=1e-5, rtol=1e-5), "mismatch vs reference"

    print("KERNEL_OK")
</pallas_src>

<mosaic_0001>
module attributes {stable_mosaic.version = 11 : i64} {
  func.func @mlp_kernel(%arg0: i32, %arg1: memref<2x128xf32, #tpu.memory_space<vmem>>, %arg2: memref<64x2xf32, #tpu.memory_space<vmem>>, %arg3: memref<64x1xf32, #tpu.memory_space<vmem>>, %arg4: memref<64x64xf32, #tpu.memory_space<vmem>>, %arg5: memref<64x1xf32, #tpu.memory_space<vmem>>, %arg6: memref<2x64xf32, #tpu.memory_space<vmem>>, %arg7: memref<2x1xf32, #tpu.memory_space<vmem>>, %arg8: memref<2x128xf32, #tpu.memory_space<vmem>>) attributes {dimension_semantics = [#tpu.dimension_semantics<parallel>], iteration_bounds = array<i64: 1>, scalar_prefetch = 0 : i64, scratch_operands = 0 : i64, tpu.core_type = #tpu.core_type<tc>, window_params = [{transform_indices = @transform_0, window_bounds = array<i64: 2, 128>}, {pipeline_mode = #tpu.pipeline_mode<synchronous>, transform_indices = @transform_1, window_bounds = array<i64: 64, 2>}, {pipeline_mode = #tpu.pipeline_mode<synchronous>, transform_indices = @transform_2, window_bounds = array<i64: 64, 1>}, {pipeline_mode = #tpu.pipeline_mode<synchronous>, transform_indices = @transform_3, window_bounds = array<i64: 64, 64>}, {pipeline_mode = #tpu.pipeline_mode<synchronous>, transform_indices = @transform_4, window_bounds = array<i64: 64, 1>}, {pipeline_mode = #tpu.pipeline_mode<synchronous>, transform_indices = @transform_5, window_bounds = array<i64: 2, 64>}, {pipeline_mode = #tpu.pipeline_mode<synchronous>, transform_indices = @transform_6, window_bounds = array<i64: 2, 1>}, {transform_indices = @transform_7, window_bounds = array<i64: 2, 128>}]} {
    %c0 = arith.constant 0 : index
    %c0_0 = arith.constant 0 : index
    %0 = vector.load %arg1[%c0, %c0_0] : memref<2x128xf32, #tpu.memory_space<vmem>>, vector<2x128xf32>
    %c0_1 = arith.constant 0 : index
    %c0_2 = arith.constant 0 : index
    %1 = vector.load %arg2[%c0_1, %c0_2] : memref<64x2xf32, #tpu.memory_space<vmem>>, vector<64x2xf32>
    %2 = vector.extract_strided_slice %1 {offsets = [0, 0], sizes = [64, 1], strides = [1, 1]} : vector<64x2xf32> to vector<64x1xf32>
    %3 = vector.extract_strided_slice %0 {offsets = [0, 0], sizes = [1, 128], strides = [1, 1]} : vector<2x128xf32> to vector<1x128xf32>
    %4 = vector.broadcast %2 : vector<64x1xf32> to vector<64x128xf32>
    %5 = vector.broadcast %3 : vector<1x128xf32> to vector<64x128xf32>
    %6 = arith.mulf %4, %5 : vector<64x128xf32>
    %7 = vector.extract_strided_slice %1 {offsets = [0, 1], sizes = [64, 1], strides = [1, 1]} : vector<64x2xf32> to vector<64x1xf32>
    %8 = vector.extract_strided_slice %0 {offsets = [1, 0], sizes = [1, 128], strides = [1, 1]} : vector<2x128xf32> to vector<1x128xf32>
    %9 = vector.broadcast %7 : vector<64x1xf32> to vector<64x128xf32>
    %10 = vector.broadcast %8 : vector<1x128xf32> to vector<64x128xf32>
    %11 = arith.mulf %9, %10 : vector<64x128xf32>
    %12 = arith.addf %6, %11 : vector<64x128xf32>
    %c0_3 = arith.constant 0 : index
    %c0_4 = arith.constant 0 : index
    %13 = vector.load %arg3[%c0_3, %c0_4] : memref<64x1xf32, #tpu.memory_space<vmem>>, vector<64x1xf32>
    %14 = vector.broadcast %13 : vector<64x1xf32> to vector<64x128xf32>
    %15 = arith.addf %12, %14 : vector<64x128xf32>
    %cst = arith.constant 0.000000e+00 : f32
    %16 = vector.broadcast %cst : f32 to vector<64x128xf32>
    %17 = arith.maximumf %15, %16 : vector<64x128xf32>
    %c0_5 = arith.constant 0 : index
    %c0_6 = arith.constant 0 : index
    %18 = vector.load %arg4[%c0_5, %c0_6] : memref<64x64xf32, #tpu.memory_space<vmem>>, vector<64x64xf32>
    %cst_7 = arith.constant dense<0.000000e+00> : vector<64x128xf32>
    %19 = tpu.matmul %18, %17, %cst_7 {dimension_numbers = #tpu.dot_dimension_numbers<[1], [0], [0], [1], [0, 0, 1, 1], [], []>} : vector<64x64xf32>, vector<64x128xf32>, vector<64x128xf32> -> vector<64x128xf32>
    %c0_8 = arith.constant 0 : index
    %c0_9 = arith.constant 0 : index
    %20 = vector.load %arg5[%c0_8, %c0_9] : memref<64x1xf32, #tpu.memory_space<vmem>>, vector<64x1xf32>
    %21 = vector.broadcast %20 : vector<64x1xf32> to vector<64x128xf32>
    %22 = arith.addf %19, %21 : vector<64x128xf32>
    %cst_10 = arith.constant 0.000000e+00 : f32
    %23 = vector.broadcast %cst_10 : f32 to vector<64x128xf32>
    %24 = arith.maximumf %22, %23 : vector<64x128xf32>
    %c0_11 = arith.constant 0 : index
    %c0_12 = arith.constant 0 : index
    %25 = vector.load %arg6[%c0_11, %c0_12] : memref<2x64xf32, #tpu.memory_space<vmem>>, vector<2x64xf32>
    %cst_13 = arith.constant dense<0.000000e+00> : vector<2x128xf32>
    %26 = tpu.matmul %25, %24, %cst_13 {dimension_numbers = #tpu.dot_dimension_numbers<[1], [0], [0], [1], [0, 0, 1, 1], [], []>} : vector<2x64xf32>, vector<64x128xf32>, vector<2x128xf32> -> vector<2x128xf32>
    %c0_14 = arith.constant 0 : index
    %c0_15 = arith.constant 0 : index
    %27 = vector.load %arg7[%c0_14, %c0_15] : memref<2x1xf32, #tpu.memory_space<vmem>>, vector<2x1xf32>
    %28 = vector.broadcast %27 : vector<2x1xf32> to vector<2x128xf32>
    %29 = arith.addf %26, %28 : vector<2x128xf32>
    %c0_16 = arith.constant 0 : index
    %c0_17 = arith.constant 0 : index
    %30 = vector.load %arg8[%c0_16, %c0_17] : memref<2x128xf32, #tpu.memory_space<vmem>>, vector<2x128xf32>
    tpu.vector_store %arg8[%c0_16, %c0_17], %29 {strides = array<i32>} : memref<2x128xf32, #tpu.memory_space<vmem>>, vector<2x128xf32>,
    return
  }
  func.func @transform_0(%arg0: i32) -> (i32, i32) {
    %c0_i32 = arith.constant 0 : i32
    %c0_i32_0 = arith.constant 0 : i32
    return %c0_i32, %arg0 : i32, i32
  }
  func.func @transform_1(%arg0: i32) -> (i32, i32) {
    %c0_i32 = arith.constant 0 : i32
    %c0_i32_0 = arith.constant 0 : i32
    %c0_i32_1 = arith.constant 0 : i32
    return %c0_i32, %c0_i32_0 : i32, i32
  }
  func.func @transform_2(%arg0: i32) -> (i32, i32) {
    %c0_i32 = arith.constant 0 : i32
    %c0_i32_0 = arith.constant 0 : i32
    %c0_i32_1 = arith.constant 0 : i32
    return %c0_i32, %c0_i32_0 : i32, i32
  }
  func.func @transform_3(%arg0: i32) -> (i32, i32) {
    %c0_i32 = arith.constant 0 : i32
    %c0_i32_0 = arith.constant 0 : i32
    %c0_i32_1 = arith.constant 0 : i32
    return %c0_i32, %c0_i32_0 : i32, i32
  }
  func.func @transform_4(%arg0: i32) -> (i32, i32) {
    %c0_i32 = arith.constant 0 : i32
    %c0_i32_0 = arith.constant 0 : i32
    %c0_i32_1 = arith.constant 0 : i32
    return %c0_i32, %c0_i32_0 : i32, i32
  }
  func.func @transform_5(%arg0: i32) -> (i32, i32) {
    %c0_i32 = arith.constant 0 : i32
    %c0_i32_0 = arith.constant 0 : i32
    %c0_i32_1 = arith.constant 0 : i32
    return %c0_i32, %c0_i32_0 : i32, i32
  }
  func.func @transform_6(%arg0: i32) -> (i32, i32) {
    %c0_i32 = arith.constant 0 : i32
    %c0_i32_0 = arith.constant 0 : i32
    %c0_i32_1 = arith.constant 0 : i32
    return %c0_i32, %c0_i32_0 : i32, i32
  }
  func.func @transform_7(%arg0: i32) -> (i32, i32) {
    %c0_i32 = arith.constant 0 : i32
    %c0_i32_0 = arith.constant 0 : i32
    return %c0_i32, %arg0 : i32, i32
  }
}

</mosaic_0001>

<llo_original>
// kernel: tpu_custom_call.1
$region0: #{tpu_custom_call.1}
  #allocation0 [shape = 'u32[]', space=smem, size = 0x4, offset = 0x4, fixed_abs, tag = 'smem constant byte address 0x4 - core index']
  #allocation1 [shape = 'u32[144,128]{1,0:T(1,128)}', space=vmem, size = 0x12000, scoped, tag = 'internal scratch']
  %s0 = inlined_call_operand.vmem [shape: f32[2,128], index: 0, kind: input, shape index: {}]
  %s1 = inlined_call_operand.vmem [shape: f32[64,2], index: 1, kind: input, shape index: {}]
  %s2 = inlined_call_operand.vmem [shape: f32[64,1], index: 2, kind: input, shape index: {}]
  %s3 = inlined_call_operand.vmem [shape: f32[64,64], index: 3, kind: input, shape index: {}]
  %s4 = inlined_call_operand.vmem [shape: f32[64,1], index: 4, kind: input, shape index: {}]
  %s5 = inlined_call_operand.vmem [shape: f32[2,64], index: 5, kind: input, shape index: {}]
  %s6 = inlined_call_operand.vmem [shape: f32[2,1], index: 6, kind: input, shape index: {}]
  %s7 = inlined_call_operand.hbm [shape: f32[2,128], index: 7, kind: output, shape index: {}]
  %s8 = sld [smem:[#allocation0]]
  $region38: #{tpu_custom_call.1} parent=0
    _
  %s10 = ssub.s32 1, %s8
  %s11 = scalar_select 0, %s10, %s8
  $region1: #{tpu_custom_call.1} parent=0
    #allocation2 [shape = 'u8[1024]{0}', space=vmem, size = 0x400, scoped, tag = 'output window, operand 0, single buffered']
    #allocation3 [shape = 's32[1]{0}', space=sflag, size = 0x4, scoped, tag = 'scoped memory for tpu_custom_call.1']
    %12 = vsyncpa [#allocation3], 0
    // Predicated region
    $region2: #{tpu_custom_call.1} parent=1 // pred_check
      _
    $region3: #{tpu_custom_call.1} parent=1 // pred_check_branch
      %14 = sbr.rel (0) target = $region5
    $region4: #{tpu_custom_call.1} parent=1 // pred_region
      _
    $region5: #{tpu_custom_call.1} parent=1 // pred_fallthru
      _
    // Predicated region
    $region6: #{tpu_custom_call.1} parent=1 // pred_check
      _
    $region7: #{tpu_custom_call.1} parent=1 // pred_check_branch
      %16 = sbr.rel (0) target = $region9
    $region8: #{tpu_custom_call.1} parent=1 // pred_region
      _
    $region9: #{tpu_custom_call.1} parent=1 // pred_fallthru
      _
    // Predicated region
    $region10: #{tpu_custom_call.1} parent=1 // pred_check
      _
    $region11: #{tpu_custom_call.1} parent=1 // pred_check_branch
      %18 = sbr.rel (0) target = $region13
    $region12: #{tpu_custom_call.1} parent=1 // pred_region
      _
    $region13: #{tpu_custom_call.1} parent=1 // pred_fallthru
      _
    // Predicated region
    $region14: #{tpu_custom_call.1} parent=1 // pred_check
      _
    $region15: #{tpu_custom_call.1} parent=1 // pred_check_branch
      %20 = sbr.rel (0) target = $region17
    $region16: #{tpu_custom_call.1} parent=1 // pred_region
      _
    $region17: #{tpu_custom_call.1} parent=1 // pred_fallthru
      _
    // Predicated region
    $region18: #{tpu_custom_call.1} parent=1 // pred_check
      _
    $region19: #{tpu_custom_call.1} parent=1 // pred_check_branch
      %22 = sbr.rel (0) target = $region21
    $region20: #{tpu_custom_call.1} parent=1 // pred_region
      _
    $region21: #{tpu_custom_call.1} parent=1 // pred_fallthru
      _
    // Predicated region
    $region22: #{tpu_custom_call.1} parent=1 // pred_check
      _
    $region23: #{tpu_custom_call.1} parent=1 // pred_check_branch
      %24 = sbr.rel (0) target = $region25
    $region24: #{tpu_custom_call.1} parent=1 // pred_region
      _
    $region25: #{tpu_custom_call.1} parent=1 // pred_fallthru
      _
    // Predicated region
    $region26: #{tpu_custom_call.1} parent=1 // pred_check
      _
    $region27: #{tpu_custom_call.1} parent=1 // pred_check_branch
      %26 = sbr.rel (0) target = $region29
    $region28: #{tpu_custom_call.1} parent=1 // pred_region
      _
    $region29: #{tpu_custom_call.1} parent=1 // pred_fallthru
      _
    %v27 = vld [vmem:[%s0] sm:$0x3]
    %v28 = vld [vmem:[%s1] sm:$0xff]
    %v29 = vld [vmem:[%s1 + $0x8] sm:$0xff]
    %v30 = vld [vmem:[%s1 + $0x10] sm:$0xff]
    %v31 = vld [vmem:[%s1 + $0x18] sm:$0xff]
    %v32 = vld [vmem:[%s1 + $0x20] sm:$0xff]
    %v33 = vld [vmem:[%s1 + $0x28] sm:$0xff]
    %v34 = vld [vmem:[%s1 + $0x30] sm:$0xff]
    %v35 = vld [vmem:[%s1 + $0x38] sm:$0xff]
    %37 = vset.pattern.permute.xlu0 0
    %38 = vperm.xlu0 %37, %v28
    %v39 = vpop.permute.xlu0 %38
    %42 = vset.pattern.permute.xlu0 0
    %43 = vperm.xlu0 %42, %v29
    %v44 = vpop.permute.xlu0 %43
    %47 = vset.pattern.permute.xlu0 0
    %48 = vperm.xlu0 %47, %v30
    %v49 = vpop.permute.xlu0 %48
    %52 = vset.pattern.permute.xlu0 0
    %53 = vperm.xlu0 %52, %v31
    %v54 = vpop.permute.xlu0 %53
    %57 = vset.pattern.permute.xlu0 0
    %58 = vperm.xlu0 %57, %v32
    %v59 = vpop.permute.xlu0 %58
    %62 = vset.pattern.permute.xlu0 0
    %63 = vperm.xlu0 %62, %v33
    %v64 = vpop.permute.xlu0 %63
    %67 = vset.pattern.permute.xlu0 0
    %68 = vperm.xlu0 %67, %v34
    %v69 = vpop.permute.xlu0 %68
    %72 = vset.pattern.permute.xlu0 0
    %73 = vperm.xlu0 %72, %v35
    %v74 = vpop.permute.xlu0 %73
    %v76 = vlaneseq
    %v77 = vshrl.u32 %v76, 7
    %v78 = vsub.s32 0, %v77
    %v79 = vrot.slane %v27, %v78
    %v80 = vmul.f32 %v39, %v79
    %v81 = vmul.f32 %v44, %v79
    %v82 = vmul.f32 %v49, %v79
    %v83 = vmul.f32 %v54, %v79
    %v84 = vmul.f32 %v59, %v79
    %v85 = vmul.f32 %v64, %v79
    %v86 = vmul.f32 %v69, %v79
    %v87 = vmul.f32 %v74, %v79
    %88 = vset.pattern.permute.xlu0 1
    %89 = vperm.xlu0 %88, %v28
    %v90 = vpop.permute.xlu0 %89
    %92 = vset.pattern.permute.xlu0 1
    %93 = vperm.xlu0 %92, %v29
    %v94 = vpop.permute.xlu0 %93
    %96 = vset.pattern.permute.xlu0 1
    %97 = vperm.xlu0 %96, %v30
    %v98 = vpop.permute.xlu0 %97
    %100 = vset.pattern.permute.xlu0 1
    %101 = vperm.xlu0 %100, %v31
    %v102 = vpop.permute.xlu0 %101
    %104 = vset.pattern.permute.xlu0 1
    %105 = vperm.xlu0 %104, %v32
    %v106 = vpop.permute.xlu0 %105
    %108 = vset.pattern.permute.xlu0 1
    %109 = vperm.xlu0 %108, %v33
    %v110 = vpop.permute.xlu0 %109
    %112 = vset.pattern.permute.xlu0 1
    %113 = vperm.xlu0 %112, %v34
    %v114 = vpop.permute.xlu0 %113
    %116 = vset.pattern.permute.xlu0 1
    %117 = vperm.xlu0 %116, %v35
    %v118 = vpop.permute.xlu0 %117
    %v120 = vlaneseq
    %v121 = vshrl.u32 %v120, 7
    %v122 = vsub.s32 1, %v121
    %v123 = vrot.slane %v27, %v122
    %v124 = vmul.f32 %v90, %v123
    %v125 = vmul.f32 %v94, %v123
    %v126 = vmul.f32 %v98, %v123
    %v127 = vmul.f32 %v102, %v123
    %v128 = vmul.f32 %v106, %v123
    %v129 = vmul.f32 %v110, %v123
    %v130 = vmul.f32 %v114, %v123
    %v131 = vmul.f32 %v118, %v123
    %v132 = vadd.f32 %v80, %v124
    %v133 = vadd.f32 %v81, %v125
    %v134 = vadd.f32 %v82, %v126
    %v135 = vadd.f32 %v83, %v127
    %v136 = vadd.f32 %v84, %v128
    %v137 = vadd.f32 %v85, %v129
    %v138 = vadd.f32 %v86, %v130
    %v139 = vadd.f32 %v87, %v131
    %v140 = vld [vmem:[%s2] sm:$0xff]
    %v141 = vld [vmem:[%s2 + $0x8] sm:$0xff]
    %v142 = vld [vmem:[%s2 + $0x10] sm:$0xff]
    %v143 = vld [vmem:[%s2 + $0x18] sm:$0xff]
    %v144 = vld [vmem:[%s2 + $0x20] sm:$0xff]
    %v145 = vld [vmem:[%s2 + $0x28] sm:$0xff]
    %v146 = vld [vmem:[%s2 + $0x30] sm:$0xff]
    %v147 = vld [vmem:[%s2 + $0x38] sm:$0xff]
    %149 = vset.pattern.permute.xlu0 0
    %150 = vperm.xlu0 %149, %v140
    %v151 = vpop.permute.xlu0 %150
    %154 = vset.pattern.permute.xlu0 0
    %155 = vperm.xlu0 %154, %v141
    %v156 = vpop.permute.xlu0 %155
    %159 = vset.pattern.permute.xlu0 0
    %160 = vperm.xlu0 %159, %v142
    %v161 = vpop.permute.xlu0 %160
    %164 = vset.pattern.permute.xlu0 0
    %165 = vperm.xlu0 %164, %v143
    %v166 = vpop.permute.xlu0 %165
    %169 = vset.pattern.permute.xlu0 0
    %170 = vperm.xlu0 %169, %v144
    %v171 = vpop.permute.xlu0 %170
    %174 = vset.pattern.permute.xlu0 0
    %175 = vperm.xlu0 %174, %v145
    %v176 = vpop.permute.xlu0 %175
    %179 = vset.pattern.permute.xlu0 0
    %180 = vperm.xlu0 %179, %v146
    %v181 = vpop.permute.xlu0 %180
    %184 = vset.pattern.permute.xlu0 0
    %185 = vperm.xlu0 %184, %v147
    %v186 = vpop.permute.xlu0 %185
    %v188 = vadd.f32 %v132, %v151
    %v189 = vadd.f32 %v133, %v156
    %v190 = vadd.f32 %v134, %v161
    %v191 = vadd.f32 %v135, %v166
    %v192 = vadd.f32 %v136, %v171
    %v193 = vadd.f32 %v137, %v176
    %v194 = vadd.f32 %v138, %v181
    %v195 = vadd.f32 %v139, %v186
    %v196 = vmax.f32 %v188, 0.0
    %v197 = vmax.f32 %v189, 0.0
    %v198 = vmax.f32 %v190, 0.0
    %v199 = vmax.f32 %v191, 0.0
    %v200 = vmax.f32 %v192, 0.0
    %v201 = vmax.f32 %v193, 0.0
    %v202 = vmax.f32 %v194, 0.0
    %v203 = vmax.f32 %v195, 0.0
    %v204 = vld [vmem:[%s3] sm:$0xff]
    %v205 = vld [vmem:[%s3 + $0x8] sm:$0xff]
    %v206 = vld [vmem:[%s3 + $0x10] sm:$0xff]
    %v207 = vld [vmem:[%s3 + $0x18] sm:$0xff]
    %v208 = vld [vmem:[%s3 + $0x20] sm:$0xff]
    %v209 = vld [vmem:[%s3 + $0x28] sm:$0xff]
    %v210 = vld [vmem:[%s3 + $0x30] sm:$0xff]
    %v211 = vld [vmem:[%s3 + $0x38] sm:$0xff]
    %v212 = vld [vmem:[%s4] sm:$0xff]
    %v213 = vld [vmem:[%s4 + $0x8] sm:$0xff]
    %v214 = vld [vmem:[%s4 + $0x10] sm:$0xff]
    %v215 = vld [vmem:[%s4 + $0x18] sm:$0xff]
    %v216 = vld [vmem:[%s4 + $0x20] sm:$0xff]
    %v217 = vld [vmem:[%s4 + $0x28] sm:$0xff]
    %v218 = vld [vmem:[%s4 + $0x30] sm:$0xff]
    %v219 = vld [vmem:[%s4 + $0x38] sm:$0xff]
    %221 = vset.pattern.permute.xlu0 0
    %222 = vperm.xlu0 %221, %v212
    %v223 = vpop.permute.xlu0 %222
    %226 = vset.pattern.permute.xlu0 0
    %227 = vperm.xlu0 %226, %v213
    %v228 = vpop.permute.xlu0 %227
    %231 = vset.pattern.permute.xlu0 0
    %232 = vperm.xlu0 %231, %v214
    %v233 = vpop.permute.xlu0 %232
    %236 = vset.pattern.permute.xlu0 0
    %237 = vperm.xlu0 %236, %v215
    %v238 = vpop.permute.xlu0 %237
    %241 = vset.pattern.permute.xlu0 0
    %242 = vperm.xlu0 %241, %v216
    %v243 = vpop.permute.xlu0 %242
    %246 = vset.pattern.permute.xlu0 0
    %247 = vperm.xlu0 %246, %v217
    %v248 = vpop.permute.xlu0 %247
    %251 = vset.pattern.permute.xlu0 0
    %252 = vperm.xlu0 %251, %v218
    %v253 = vpop.permute.xlu0 %252
    %256 = vset.pattern.permute.xlu0 0
    %257 = vperm.xlu0 %256, %v219
    %v258 = vpop.permute.xlu0 %257
    %vm260 = vcmask 523264
    %v262 = vsel %vm260, %v204, 0
    %v265 = vsel %vm260, %v205, 0
    %v268 = vsel %vm260, %v206, 0
    %v271 = vsel %vm260, %v207, 0
    %v274 = vsel %vm260, %v208, 0
    %v277 = vsel %vm260, %v209, 0
    %v280 = vsel %vm260, %v210, 0
    %v283 = vsel %vm260, %v211, 0
    %285 = vmatprep.subr.mxu0 0.0
    %286 = vmatpush1.msra.mxu0 %v196
    %287 = vmatprep.subr.mxu0 0.0
    %288 = vmatpush1.msra.mxu0 %v197
    %289 = vmatprep.subr.mxu0 0.0
    %290 = vmatpush1.msra.mxu0 %v198
    %291 = vmatprep.subr.mxu0 0.0
    %292 = vmatpush1.msra.mxu0 %v199
    %293 = vmatprep.subr.mxu0 0.0
    %294 = vmatpush1.msra.mxu0 %v200
    %295 = vmatprep.subr.mxu0 0.0
    %296 = vmatpush1.msra.mxu0 %v201
    %297 = vmatprep.subr.mxu0 0.0
    %298 = vmatpush1.msra.mxu0 %v202
    %299 = vmatprep.subr.mxu0 0.0
    %300 = vmatpush1.msra.mxu0 %v203
    %301 = vmatprep.subr.mxu0 0.0
    %302 = vmatpush1.msra.mxu0 0.0
    %303 = vmatprep.subr.mxu0 0.0
    %304 = vmatpush1.msra.mxu0 0.0
    %305 = vmatprep.subr.mxu0 0.0
    %306 = vmatpush1.msra.mxu0 0.0
    %307 = vmatprep.subr.mxu0 0.0
    %308 = vmatpush1.msra.mxu0 0.0
    %309 = vmatprep.subr.mxu0 0.0
    %310 = vmatpush1.msra.mxu0 0.0
    %311 = vmatprep.subr.mxu0 0.0
    %312 = vmatpush1.msra.mxu0 0.0
    %313 = vmatprep.subr.mxu0 0.0
    %314 = vmatpush1.msra.mxu0 0.0
    %315 = vmatprep.subr.mxu0 0.0
    %316 = vmatpush1.msra.mxu0 0.0
    %317 = vmatprep.subr.mxu0 0.0
    %318 = vmatpush1.msra.mxu0 0.0
    %319 = vmatprep.subr.mxu0 0.0
    %320 = vmatpush1.msra.mxu0 0.0
    %321 = vmatprep.subr.mxu0 0.0
    %322 = vmatpush1.msra.mxu0 0.0
    %323 = vmatprep.subr.mxu0 0.0
    %324 = vmatpush1.msra.mxu0 0.0
    %325 = vmatprep.subr.mxu0 0.0
    %326 = vmatpush1.msra.mxu0 0.0
    %327 = vmatprep.subr.mxu0 0.0
    %328 = vmatpush1.msra.mxu0 0.0
    %329 = vmatprep.subr.mxu0 0.0
    %330 = vmatpush1.msra.mxu0 0.0
    %331 = vmatprep.subr.mxu0 0.0
    %332 = vmatpush1.msra.mxu0 0.0
    %333 = vmatprep.subr.mxu0 0.0
    %334 = vmatpush1.msra.mxu0 0.0
    %335 = vmatprep.subr.mxu0 0.0
    %336 = vmatpush1.msra.mxu0 0.0
    %337 = vmatprep.subr.mxu0 0.0
    %338 = vmatpush1.msra.mxu0 0.0
    %339 = vmatprep.subr.mxu0 0.0
    %340 = vmatpush1.msra.mxu0 0.0
    %341 = vmatprep.subr.mxu0 0.0
    %342 = vmatpush1.msra.mxu0 0.0
    %343 = vmatprep.subr.mxu0 0.0
    %344 = vmatpush1.msra.mxu0 0.0
    %345 = vmatprep.subr.mxu0 0.0
    %346 = vmatpush1.msra.mxu0 0.0
    %347 = vmatprep.subr.mxu0 0.0
    %348 = vmatpush1.msra.mxu0 0.0
    %349 = vmatprep.mubr.f32.mxu0 0.0
    %350 = vmatmul.mubr.f32.gmra.mrb[0].mxu0 %v262
    %v351 = vpop.f32.mrb[0].mxu0
    %v352 = vadd.f32 %v223, %v351
    %v353 = vpop.f32.mrb[0].mxu0
    %354 = vmatprep.mubr.f32.mxu0 0.0
    %355 = vmatmul.mubr.f32.gmra.mrb[0].mxu0 %v265
    %v356 = vpop.f32.mrb[0].mxu0
    %v357 = vadd.f32 %v228, %v356
    %v358 = vpop.f32.mrb[0].mxu0
    %359 = vmatprep.mubr.f32.mxu0 0.0
    %360 = vmatmul.mubr.f32.gmra.mrb[0].mxu0 %v268
    %v361 = vpop.f32.mrb[0].mxu0
    %v362 = vadd.f32 %v233, %v361
    %v363 = vpop.f32.mrb[0].mxu0
    %364 = vmatprep.mubr.f32.mxu0 0.0
    %365 = vmatmul.mubr.f32.gmra.mrb[0].mxu0 %v271
    %v366 = vpop.f32.mrb[0].mxu0
    %v367 = vadd.f32 %v238, %v366
    %v368 = vpop.f32.mrb[0].mxu0
    %369 = vmatprep.mubr.f32.mxu0 0.0
    %370 = vmatmul.mubr.f32.gmra.mrb[0].mxu0 %v274
    %v371 = vpop.f32.mrb[0].mxu0
    %v372 = vadd.f32 %v243, %v371
    %v373 = vpop.f32.mrb[0].mxu0
    %374 = vmatprep.mubr.f32.mxu0 0.0
    %375 = vmatmul.mubr.f32.gmra.mrb[0].mxu0 %v277
    %v376 = vpop.f32.mrb[0].mxu0
    %v377 = vadd.f32 %v248, %v376
    %v378 = vpop.f32.mrb[0].mxu0
    %379 = vmatprep.mubr.f32.mxu0 0.0
    %380 = vmatmul.mubr.f32.gmra.mrb[0].mxu0 %v280
    %v381 = vpop.f32.mrb[0].mxu0
    %v382 = vadd.f32 %v253, %v381
    %v383 = vpop.f32.mrb[0].mxu0
    %384 = vmatprep.mubr.f32.mxu0 0.0
    %385 = vmatmul.mubr.f32.gmra.mrb[0].mxu0 %v283
    %v386 = vpop.f32.mrb[0].mxu0
    %v387 = vadd.f32 %v258, %v386
    %v388 = vpop.f32.mrb[0].mxu0
    %389 = vdwg.mxu0
    %v390 = vmax.f32 %v352, 0.0
    %v391 = vmax.f32 %v357, 0.0
    %v392 = vmax.f32 %v362, 0.0
    %v393 = vmax.f32 %v367, 0.0
    %v394 = vmax.f32 %v372, 0.0
    %v395 = vmax.f32 %v377, 0.0
    %v396 = vmax.f32 %v382, 0.0
    %v397 = vmax.f32 %v387, 0.0
    %v398 = vld [vmem:[%s5] sm:$0x3]
    %v399 = vld [vmem:[%s6] sm:$0x3]
    %401 = vset.pattern.permute.xlu0 0
    %402 = vperm.xlu0 %401, %v399
    %v403 = vpop.permute.xlu0 %402
    %v406 = vsel %vm260, %v398, 0
    %408 = vmatprep.subr.mxu0 0.0
    %409 = vmatpush1.msra.mxu0 %v390
    %410 = vmatprep.subr.mxu0 0.0
    %411 = vmatpush1.msra.mxu0 %v391
    %412 = vmatprep.subr.mxu0 0.0
    %413 = vmatpush1.msra.mxu0 %v392
    %414 = vmatprep.subr.mxu0 0.0
    %415 = vmatpush1.msra.mxu0 %v393
    %416 = vmatprep.subr.mxu0 0.0
    %417 = vmatpush1.msra.mxu0 %v394
    %418 = vmatprep.subr.mxu0 0.0
    %419 = vmatpush1.msra.mxu0 %v395
    %420 = vmatprep.subr.mxu0 0.0
    %421 = vmatpush1.msra.mxu0 %v396
    %422 = vmatprep.subr.mxu0 0.0
    %423 = vmatpush1.msra.mxu0 %v397
    %424 = vmatprep.subr.mxu0 0.0
    %425 = vmatpush1.msra.mxu0 0.0
    %426 = vmatprep.subr.mxu0 0.0
    %427 = vmatpush1.msra.mxu0 0.0
    %428 = vmatprep.subr.mxu0 0.0
    %429 = vmatpush1.msra.mxu0 0.0
    %430 = vmatprep.subr.mxu0 0.0
    %431 = vmatpush1.msra.mxu0 0.0
    %432 = vmatprep.subr.mxu0 0.0
    %433 = vmatpush1.msra.mxu0 0.0
    %434 = vmatprep.subr.mxu0 0.0
    %435 = vmatpush1.msra.mxu0 0.0
    %436 = vmatprep.subr.mxu0 0.0
    %437 = vmatpush1.msra.mxu0 0.0
    %438 = vmatprep.subr.mxu0 0.0
    %439 = vmatpush1.msra.mxu0 0.0
    %440 = vmatprep.subr.mxu0 0.0
    %441 = vmatpush1.msra.mxu0 0.0
    %442 = vmatprep.subr.mxu0 0.0
    %443 = vmatpush1.msra.mxu0 0.0
    %444 = vmatprep.subr.mxu0 0.0
    %445 = vmatpush1.msra.mxu0 0.0
    %446 = vmatprep.subr.mxu0 0.0
    %447 = vmatpush1.msra.mxu0 0.0
    %448 = vmatprep.subr.mxu0 0.0
    %449 = vmatpush1.msra.mxu0 0.0
    %450 = vmatprep.subr.mxu0 0.0
    %451 = vmatpush1.msra.mxu0 0.0
    %452 = vmatprep.subr.mxu0 0.0
    %453 = vmatpush1.msra.mxu0 0.0
    %454 = vmatprep.subr.mxu0 0.0
    %455 = vmatpush1.msra.mxu0 0.0
    %456 = vmatprep.subr.mxu0 0.0
    %457 = vmatpush1.msra.mxu0 0.0
    %458 = vmatprep.subr.mxu0 0.0
    %459 = vmatpush1.msra.mxu0 0.0
    %460 = vmatprep.subr.mxu0 0.0
    %461 = vmatpush1.msra.mxu0 0.0
    %462 = vmatprep.subr.mxu0 0.0
    %463 = vmatpush1.msra.mxu0 0.0
    %464 = vmatprep.subr.mxu0 0.0
    %465 = vmatpush1.msra.mxu0 0.0
    %466 = vmatprep.subr.mxu0 0.0
    %467 = vmatpush1.msra.mxu0 0.0
    %468 = vmatprep.subr.mxu0 0.0
    %469 = vmatpush1.msra.mxu0 0.0
    %470 = vmatprep.subr.mxu0 0.0
    %471 = vmatpush1.msra.mxu0 0.0
    %472 = vmatprep.mubr.f32.mxu0 0.0
    %473 = vmatmul.mubr.f32.gmra.mrb[0].mxu0 %v406
    %v474 = vpop.f32.mrb[0].mxu0
    %v475 = vadd.f32 %v403, %v474
    %v476 = vpop.f32.mrb[0].mxu0
    %477 = vdwg.mxu0
    %478 = vst [vmem:[#allocation2] sm:$0x3] %v475
    // Predicated region
    $region30: #{tpu_custom_call.1} parent=1 // pred_check
      _
    $region31: #{tpu_custom_call.1} parent=1 // pred_check_branch
      %480 = sbr.rel (0) target = $region33
    $region32: #{tpu_custom_call.1} parent=1 // pred_region
      %s482 = ssub.s32 32, 32
      %483 = vsyncadd [#allocation3], %s482
      %s485 = sshll.u32 [#allocation2], 4
      %s486 = int_to_ptr.vmem [resolvable:$true] %s485
      %488 = dma.vmem_to_hbm [thread:$0]  %s486, 32, %s7, [#allocation3]
    $region33: #{tpu_custom_call.1} parent=1 // pred_fallthru
      _
    // Predicated region
    $region34: #{tpu_custom_call.1} parent=1 // pred_check
      _
    $region35: #{tpu_custom_call.1} parent=1 // pred_check_branch
      %490 = sbr.rel (0) target = $region37
    $region36: #{tpu_custom_call.1} parent=1 // pred_region
      %491 = dma.done [#allocation3], 32
    $region37: #{tpu_custom_call.1} parent=1 // pred_fallthru
      _
    %492 = vsyncpa [#allocation3], 1

</llo_original>
